<compile_context>
chip_gen: v6e
topology: v6e:2x2x1
jax: 0.10.0
libtpu: 0.0.40
codegen_flags: <defaults>
</compile_context>

<pallas_src>
import functools
import math

import jax
import jax.numpy as jnp
from jax.experimental import pallas as pl
from jax.experimental.pallas import tpu as pltpu


_NEG_BIG = -1e30  # masked-logit value: exp() underflows to exactly 0 in f32.


def _round_up(a: int, b: int) -> int:
    return (a + b - 1) // b * b


def _cdiv(a: int, b: int) -> int:
    return (a + b - 1) // b


def _device_defaults():
    """Per-generation defaults: (vocab tile, vmem limit bytes, ensure >=2 row tiles)."""
    try:
        vmem_cap = int(pltpu.get_tpu_info().vmem_capacity_bytes)
    except Exception:
        vmem_cap = 128 * 1024 * 1024
    if vmem_cap <= 64 * 1024 * 1024:
        # v7x-class: 64 MiB VMEM per TC, 2 TCs/chip -> smaller tiles, headroom, and at
        # least two row tiles so the second TensorCore is not idle.
        return 1024, 48 * 1024 * 1024, True
    # v5e / v6e: 128 MiB VMEM, single TC.
    return 2048, 64 * 1024 * 1024, False


def _generator_kernel(x_ref, w_ref, b_ref, o_ref, acc_sc, m_sc, l_sc, lse_sc,
                      *, vocab, d_model, tn, tk):
    """Fused linear + log_softmax.

    Grid: (row tile i, sweep s, vocab tile j, d_model tile k), k innermost.
    Sweep 0 accumulates the online (max, sum-exp) stats for the row tile; the last sweep
    recomputes the logits tile and writes (logits - lse).  When n_sweeps == 1 (single
    vocab tile) both happen in the same grid step.
    """
    s = pl.program_id(1)
    j = pl.program_id(2)
    k = pl.program_id(3)
    n_s = pl.num_programs(1)
    n_j = pl.num_programs(2)
    n_k = pl.num_programs(3)

    @pl.when((s == 0) & (j == 0) & (k == 0))
    def _init_stats():  # new row tile: reset running stats
        m_sc[...] = jnp.full(m_sc.shape, -jnp.inf, jnp.float32)
        l_sc[...] = jnp.zeros(l_sc.shape, jnp.float32)

    @pl.when(k == 0)
    def _zero_acc():
        acc_sc[...] = jnp.zeros(acc_sc.shape, jnp.float32)

    w_blk = w_ref[...]
    if d_model % tk != 0:
        # Partial last K block: zero out-of-range weight rows (x's padded K lanes are
        # already exact zeros, but 0 * garbage could still be NaN).
        row = jax.lax.broadcasted_iota(jnp.int32, w_blk.shape, 0) + k * tk
        w_blk = jnp.where(row < d_model, w_blk, jnp.zeros_like(w_blk))

    # MXU matmul with f32 accumulation (bf16 inputs welcome).
    acc_sc[...] += jnp.dot(x_ref[k], w_blk, preferred_element_type=jnp.float32)

    @pl.when(k == n_k - 1)
    def _vocab_tile_done():
        logits = acc_sc[...] + b_ref[...].astype(jnp.float32)
        if vocab % tn != 0:
            # Partial last vocab tile: force out-of-range columns to a huge negative so
            # they never perturb the softmax (their output columns are write-masked).
            col = jax.lax.broadcasted_iota(jnp.int32, logits.shape, 1) + j * tn
            logits = jnp.where(col < vocab, logits, jnp.full_like(logits, _NEG_BIG))

        @pl.when(s == 0)
        def _online_stats():
            m_prev = m_sc[...]
            m_new = jnp.maximum(m_prev, jnp.max(logits, axis=-1, keepdims=True))
            l_sc[...] = l_sc[...] * jnp.exp(m_prev - m_new) + jnp.sum(
                jnp.exp(logits - m_new), axis=-1, keepdims=True)
            m_sc[...] = m_new

            @pl.when(j == n_j - 1)
            def _finalize_lse():
                lse_sc[...] = m_sc[...] + jnp.log(l_sc[...])

        @pl.when(s == n_s - 1)
        def _write_output():
            o_ref[...] = (logits - lse_sc[...]).astype(o_ref.dtype)


def generator_forward(x, weight, bias, *, tm=512, tn=None, tk=1024,
                      vmem_limit_bytes=None):
    """log_softmax(x @ weight + bias, axis=-1).

    x: (..., d_model); weight: (d_model, vocab); bias: (vocab,).
    Returns (..., vocab) in x.dtype; matmul accumulation and softmax math run in f32.
    """
    d_model, vocab = weight.shape
    lead = x.shape[:-1]
    x2d = x.reshape(-1, d_model)
    M = x2d.shape[0]
    out_dtype = x.dtype

    tn_default, vmem_default, two_row_tiles = _device_defaults()
    if tn is None:
        tn = tn_default
    if vmem_limit_bytes is None:
        vmem_limit_bytes = vmem_default

    # Effective tiles: (8, 128)-aligned, shrunk for tiny problems; no divisibility
    # requirements -- edge blocks are handled by cdiv grids + in-kernel masking.
    tm_eff = min(_round_up(tm, 8), _round_up(M, 8))
    tn_eff = min(_round_up(tn, 128), _round_up(vocab, 128))
    tk_eff = min(tk, d_model)
    if tk_eff < d_model:
        tk_eff = max(8, (tk_eff // 8) * 8)

    n_i = _cdiv(M, tm_eff)
    if two_row_tiles and n_i < 2 and M >= 16:
        tm_eff = _round_up(_cdiv(M, 2), 8)  # keep both v7x TensorCores busy
        n_i = _cdiv(M, tm_eff)
    n_j = _cdiv(vocab, tn_eff)
    n_k = _cdiv(d_model, tk_eff)
    n_s = 1 if n_j == 1 else 2  # single vocab tile -> single-sweep fast path

    # x laid out as (n_k, M, tk): VMEM-resident per row tile, indexed by the K grid step
    # inside the kernel.  Zero-padding x's K tail is cheap (x << weight); the weight is
    # never padded or copied.
    Kp = n_k * tk_eff
    if Kp != d_model:
        x2d = jnp.pad(x2d, ((0, 0), (0, Kp - d_model)))
    x3d = jnp.transpose(x2d.reshape(M, n_k, tk_eff), (1, 0, 2))
    b2d = bias.reshape(1, vocab)

    kernel = functools.partial(_generator_kernel, vocab=vocab, d_model=d_model,
                               tn=tn_eff, tk=tk_eff)

    w_isz = jnp.dtype(weight.dtype).itemsize
    x_isz = jnp.dtype(x.dtype).itemsize
    out_isz = jnp.dtype(out_dtype).itemsize
    bytes_accessed = int(M * Kp * x_isz
                         + n_i * n_s * d_model * vocab * w_isz  # weight re-streamed
                         + n_i * n_s * vocab * jnp.dtype(bias.dtype).itemsize
                         + M * vocab * out_isz)

    out2d = pl.pallas_call(
        kernel,
        out_shape=jax.ShapeDtypeStruct((M, vocab), out_dtype),
        grid_spec=pltpu.PrefetchScalarGridSpec(
            num_scalar_prefetch=0,
            grid=(n_i, n_s, n_j, n_k),
            in_specs=[
                # x: whole row tile resident across sweeps / vocab tiles / K steps.
                pl.BlockSpec((n_k, tm_eff, tk_eff), lambda i, s, j, k: (0, i, 0)),
                # weight: streamed (tk, tn) blocks.
                # NOTE: on v5e/v6e, pipeline_mode=pl.Buffered(3) here is an option if
                # profiling still shows exposed weight DMA (VMEM headroom exists there).
                pl.BlockSpec((tk_eff, tn_eff), lambda i, s, j, k: (k, j)),
                # bias: one lane-dense block per vocab tile.
                pl.BlockSpec((1, tn_eff), lambda i, s, j, k: (0, j)),
            ],
            # Sweep 0 writes nothing, so map it onto block (i, 0); each output block is
            # only flushed after the final sweep writes it (flash-attention pattern).
            out_specs=pl.BlockSpec((tm_eff, tn_eff), lambda i, s, j, k: (i, j * s)),
            scratch_shapes=[
                pltpu.VMEM((tm_eff, tn_eff), jnp.float32),  # K accumulator
                pltpu.VMEM((tm_eff, 1), jnp.float32),       # running max
                pltpu.VMEM((tm_eff, 1), jnp.float32),       # running sum-of-exp
                pltpu.VMEM((tm_eff, 1), jnp.float32),       # log-sum-exp
            ],
        ),
        compiler_params=pltpu.CompilerParams(
            dimension_semantics=("parallel", "arbitrary", "arbitrary", "arbitrary"),
            vmem_limit_bytes=vmem_limit_bytes),
        cost_estimate=pl.CostEstimate(
            flops=2 * M * d_model * vocab * n_s,
            transcendentals=M * vocab,
            bytes_accessed=bytes_accessed),
    )(x3d, weight, b2d)

    return out2d.reshape(*lead, vocab)


def init_generator_params(key, d_model, vocab, dtype=jnp.bfloat16):
    # Matches nn.Linear default init: U(-1/sqrt(in_features), +1/sqrt(in_features)).
    kw, kb = jax.random.split(key)
    bound = 1.0 / math.sqrt(d_model)
    weight = jax.random.uniform(kw, (d_model, vocab), jnp.float32, -bound, bound).astype(dtype)
    bias = jax.random.uniform(kb, (vocab,), jnp.float32, -bound, bound).astype(dtype)
    return weight, bias


if __name__ == "__main__":
    key = jax.random.PRNGKey(0)
    k1, k2, k3, k4, k5, k6 = jax.random.split(key, 6)

    # --- Config 1: bf16, aligned shapes, single vocab tile -> single-sweep fast path. ---
    batch, seq, d_model, vocab = 2, 8, 128, 512
    x = jax.random.normal(k1, (batch, seq, d_model), jnp.float32).astype(jnp.bfloat16)
    weight, bias = init_generator_params(k2, d_model, vocab, dtype=jnp.bfloat16)

    out = jax.block_until_ready(generator_forward(x, weight, bias))
    assert out.shape == (batch, seq, vocab) and out.dtype == jnp.bfloat16

    ref = jax.nn.log_softmax(
        jnp.einsum("bsd,dv->bsv", x.astype(jnp.float32), weight.astype(jnp.float32))
        + bias.astype(jnp.float32), axis=-1)
    err = jnp.max(jnp.abs(out.astype(jnp.float32) - ref))
    assert err < 1e-1, f"config 1 max abs err {err}"

    # --- Config 2: f32, ragged rows (14) and vocab (500), forced small tiles ->
    #     multiple (partial) row tiles, 4 vocab tiles, two-sweep online-LSE + masking. ---
    batch2, seq2, d_model2, vocab2 = 2, 7, 64, 500
    x2 = jax.random.normal(k3, (batch2, seq2, d_model2), jnp.float32)
    w2, b2 = init_generator_params(k4, d_model2, vocab2, dtype=jnp.float32)

    out2 = jax.block_until_ready(generator_forward(x2, w2, b2, tm=8, tn=128))
    assert out2.shape == (batch2, seq2, vocab2) and out2.dtype == jnp.float32

    ref2 = jax.nn.log_softmax(jnp.einsum("bsd,dv->bsv", x2, w2) + b2, axis=-1)
    err2 = jnp.max(jnp.abs(out2 - ref2))
    assert err2 < 1e-4, f"config 2 max abs err {err2}"

    # --- Config 3: f32, ragged d_model (96) with forced tk=64 -> K-tiled accumulation
    #     with in-kernel masking of the partial last K block. ---
    batch3, seq3, d_model3, vocab3 = 2, 8, 96, 384
    x3 = jax.random.normal(k5, (batch3, seq3, d_model3), jnp.float32)
    w3, b3 = init_generator_params(k6, d_model3, vocab3, dtype=jnp.float32)

    out3 = jax.block_until_ready(generator_forward(x3, w3, b3, tk=64))
    assert out3.shape == (batch3, seq3, vocab3) and out3.dtype == jnp.float32

    ref3 = jax.nn.log_softmax(jnp.einsum("bsd,dv->bsv", x3, w3) + b3, axis=-1)
    err3 = jnp.max(jnp.abs(out3 - ref3))
    assert err3 < 1e-4, f"config 3 max abs err {err3}"

    print("KERNEL_OK")
</pallas_src>

<mosaic_0001>
module attributes {stable_mosaic.version = 11 : i64} {
  func.func @_generator_kernel(%arg0: i32, %arg1: i32, %arg2: i32, %arg3: i32, %arg4: memref<1x16x128xbf16, #tpu.memory_space<vmem>>, %arg5: memref<128x512xbf16, #tpu.memory_space<vmem>>, %arg6: memref<1x512xbf16, #tpu.memory_space<vmem>>, %arg7: memref<16x512xbf16, #tpu.memory_space<vmem>>, %arg8: memref<16x512xf32, #tpu.memory_space<vmem>>, %arg9: memref<16x1xf32, #tpu.memory_space<vmem>>, %arg10: memref<16x1xf32, #tpu.memory_space<vmem>>, %arg11: memref<16x1xf32, #tpu.memory_space<vmem>>) attributes {dimension_semantics = [#tpu.dimension_semantics<parallel>, #tpu.dimension_semantics<arbitrary>, #tpu.dimension_semantics<arbitrary>, #tpu.dimension_semantics<arbitrary>], iteration_bounds = array<i64: 1, 1, 1, 1>, scalar_prefetch = 0 : i64, scratch_operands = 4 : i64, tpu.core_type = #tpu.core_type<tc>, window_params = [{transform_indices = @transform_0, window_bounds = array<i64: 1, 16, 128>}, {transform_indices = @transform_1, window_bounds = array<i64: 128, 512>}, {transform_indices = @transform_2, window_bounds = array<i64: 1, 512>}, {transform_indices = @transform_3, window_bounds = array<i64: 16, 512>}]} {
    %c0_i32 = arith.constant 0 : i32
    %0 = arith.cmpi eq, %arg1, %c0_i32 : i32
    %c0_i32_0 = arith.constant 0 : i32
    %1 = arith.cmpi eq, %arg2, %c0_i32_0 : i32
    %2 = arith.andi %0, %1 : i1
    %c0_i32_1 = arith.constant 0 : i32
    %3 = arith.cmpi eq, %arg3, %c0_i32_1 : i32
    %4 = arith.andi %2, %3 : i1
    %5 = arith.extui %4 : i1 to i32
    %c0_i32_2 = arith.constant 0 : i32
    %6 = arith.cmpi ne, %5, %c0_i32_2 : i32
    scf.if %6 {
      %cst_14 = arith.constant 0xFF800000 : f32
      %21 = vector.broadcast %cst_14 : f32 to vector<16x1xf32>
      %c0_15 = arith.constant 0 : index
      %c0_16 = arith.constant 0 : index
      %22 = vector.load %arg9[%c0_15, %c0_16] : memref<16x1xf32, #tpu.memory_space<vmem>>, vector<16x1xf32>
      tpu.vector_store %arg9[%c0_15, %c0_16], %21 {strides = array<i32>} : memref<16x1xf32, #tpu.memory_space<vmem>>, vector<16x1xf32>,
      %cst_17 = arith.constant 0.000000e+00 : f32
      %23 = vector.broadcast %cst_17 : f32 to vector<16x1xf32>
      %c0_18 = arith.constant 0 : index
      %c0_19 = arith.constant 0 : index
      %24 = vector.load %arg10[%c0_18, %c0_19] : memref<16x1xf32, #tpu.memory_space<vmem>>, vector<16x1xf32>
      tpu.vector_store %arg10[%c0_18, %c0_19], %23 {strides = array<i32>} : memref<16x1xf32, #tpu.memory_space<vmem>>, vector<16x1xf32>,
    } else {
    }
    %c0_i32_3 = arith.constant 0 : i32
    %7 = arith.cmpi eq, %arg3, %c0_i32_3 : i32
    %8 = arith.extui %7 : i1 to i32
    %c0_i32_4 = arith.constant 0 : i32
    %9 = arith.cmpi ne, %8, %c0_i32_4 : i32
    scf.if %9 {
      %cst_14 = arith.constant 0.000000e+00 : f32
      %21 = vector.broadcast %cst_14 : f32 to vector<16x512xf32>
      %c0_15 = arith.constant 0 : index
      %c0_16 = arith.constant 0 : index
      %22 = vector.load %arg8[%c0_15, %c0_16] : memref<16x512xf32, #tpu.memory_space<vmem>>, vector<16x512xf32>
      tpu.vector_store %arg8[%c0_15, %c0_16], %21 {strides = array<i32>} : memref<16x512xf32, #tpu.memory_space<vmem>>, vector<16x512xf32>,
    } else {
    }
    %c0 = arith.constant 0 : index
    %c0_5 = arith.constant 0 : index
    %10 = vector.load %arg5[%c0, %c0_5] : memref<128x512xbf16, #tpu.memory_space<vmem>>, vector<128x512xbf16>
    %c0_6 = arith.constant 0 : index
    %c0_7 = arith.constant 0 : index
    %11 = vector.load %arg8[%c0_6, %c0_7] : memref<16x512xf32, #tpu.memory_space<vmem>>, vector<16x512xf32>
    %12 = arith.index_cast %arg3 : i32 to index
    %c0_8 = arith.constant 0 : index
    %c0_9 = arith.constant 0 : index
    %13 = vector.load %arg4[%12, %c0_8, %c0_9] : memref<1x16x128xbf16, #tpu.memory_space<vmem>>, vector<1x16x128xbf16>
    %14 = vector.shape_cast %13 : vector<1x16x128xbf16> to vector<16x128xbf16>
    %cst = arith.constant dense<0.000000e+00> : vector<16x512xf32>
    %15 = tpu.matmul %14, %10, %cst {dimension_numbers = #tpu.dot_dimension_numbers<[1], [0], [0], [1], [0, 0, 1, 1], [], []>} : vector<16x128xbf16>, vector<128x512xbf16>, vector<16x512xf32> -> vector<16x512xf32>
    %16 = arith.addf %11, %15 : vector<16x512xf32>
    %c0_10 = arith.constant 0 : index
    %c0_11 = arith.constant 0 : index
    %17 = vector.load %arg8[%c0_10, %c0_11] : memref<16x512xf32, #tpu.memory_space<vmem>>, vector<16x512xf32>
    tpu.vector_store %arg8[%c0_10, %c0_11], %16 {strides = array<i32>} : memref<16x512xf32, #tpu.memory_space<vmem>>, vector<16x512xf32>,
    %c0_i32_12 = arith.constant 0 : i32
    %18 = arith.cmpi eq, %arg3, %c0_i32_12 : i32
    %19 = arith.extui %18 : i1 to i32
    %c0_i32_13 = arith.constant 0 : i32
    %20 = arith.cmpi ne, %19, %c0_i32_13 : i32
    scf.if %20 {
      %c0_14 = arith.constant 0 : index
      %c0_15 = arith.constant 0 : index
      %21 = vector.load %arg8[%c0_14, %c0_15] : memref<16x512xf32, #tpu.memory_space<vmem>>, vector<16x512xf32>
      %c0_16 = arith.constant 0 : index
      %c0_17 = arith.constant 0 : index
      %22 = vector.load %arg6[%c0_16, %c0_17] : memref<1x512xbf16, #tpu.memory_space<vmem>>, vector<1x512xbf16>
      %23 = arith.extf %22 : vector<1x512xbf16> to vector<1x512xf32>
      %24 = vector.broadcast %23 : vector<1x512xf32> to vector<16x512xf32>
      %25 = arith.addf %21, %24 : vector<16x512xf32>
      %c0_i32_18 = arith.constant 0 : i32
      %26 = arith.cmpi eq, %arg1, %c0_i32_18 : i32
      %27 = arith.extui %26 : i1 to i32
      %c0_i32_19 = arith.constant 0 : i32
      %28 = arith.cmpi ne, %27, %c0_i32_19 : i32
      scf.if %28 {
        %c0_22 = arith.constant 0 : index
        %c0_23 = arith.constant 0 : index
        %32 = vector.load %arg9[%c0_22, %c0_23] : memref<16x1xf32, #tpu.memory_space<vmem>>, vector<16x1xf32>
        %cst_24 = arith.constant dense<0xFF800000> : vector<16xf32>
        %33 = vector.multi_reduction <maximumf>, %25, %cst_24 [1] : vector<16x512xf32> to vector<16xf32>
        %34 = vector.shape_cast %33 : vector<16xf32> to vector<16x1xf32>
        %35 = arith.maximumf %32, %34 : vector<16x1xf32>
        %c0_25 = arith.constant 0 : index
        %c0_26 = arith.constant 0 : index
        %36 = vector.load %arg10[%c0_25, %c0_26] : memref<16x1xf32, #tpu.memory_space<vmem>>, vector<16x1xf32>
        %37 = arith.subf %32, %35 : vector<16x1xf32>
        %38 = math.exp %37 : vector<16x1xf32>
        %39 = arith.mulf %36, %38 : vector<16x1xf32>
        %40 = vector.broadcast %35 : vector<16x1xf32> to vector<16x512xf32>
        %41 = arith.subf %25, %40 : vector<16x512xf32>
        %42 = math.exp %41 : vector<16x512xf32>
        %cst_27 = arith.constant dense<0.000000e+00> : vector<16xf32>
        %43 = vector.multi_reduction <add>, %42, %cst_27 [1] : vector<16x512xf32> to vector<16xf32>
        %44 = vector.shape_cast %43 : vector<16xf32> to vector<16x1xf32>
        %45 = arith.addf %39, %44 : vector<16x1xf32>
        %c0_28 = arith.constant 0 : index
        %c0_29 = arith.constant 0 : index
        %46 = vector.load %arg10[%c0_28, %c0_29] : memref<16x1xf32, #tpu.memory_space<vmem>>, vector<16x1xf32>
        tpu.vector_store %arg10[%c0_28, %c0_29], %45 {strides = array<i32>} : memref<16x1xf32, #tpu.memory_space<vmem>>, vector<16x1xf32>,
        %c0_30 = arith.constant 0 : index
        %c0_31 = arith.constant 0 : index
        %47 = vector.load %arg9[%c0_30, %c0_31] : memref<16x1xf32, #tpu.memory_space<vmem>>, vector<16x1xf32>
        tpu.vector_store %arg9[%c0_30, %c0_31], %35 {strides = array<i32>} : memref<16x1xf32, #tpu.memory_space<vmem>>, vector<16x1xf32>,
        %c0_i32_32 = arith.constant 0 : i32
        %48 = arith.cmpi eq, %arg2, %c0_i32_32 : i32
        %49 = arith.extui %48 : i1 to i32
        %c0_i32_33 = arith.constant 0 : i32
        %50 = arith.cmpi ne, %49, %c0_i32_33 : i32
        scf.if %50 {
          %c0_34 = arith.constant 0 : index
          %c0_35 = arith.constant 0 : index
          %51 = vector.load %arg9[%c0_34, %c0_35] : memref<16x1xf32, #tpu.memory_space<vmem>>, vector<16x1xf32>
          %c0_36 = arith.constant 0 : index
          %c0_37 = arith.constant 0 : index
          %52 = vector.load %arg10[%c0_36, %c0_37] : memref<16x1xf32, #tpu.memory_space<vmem>>, vector<16x1xf32>
          %53 = math.log %52 : vector<16x1xf32>
          %54 = arith.addf %51, %53 : vector<16x1xf32>
          %c0_38 = arith.constant 0 : index
          %c0_39 = arith.constant 0 : index
          %55 = vector.load %arg11[%c0_38, %c0_39] : memref<16x1xf32, #tpu.memory_space<vmem>>, vector<16x1xf32>
          tpu.vector_store %arg11[%c0_38, %c0_39], %54 {strides = array<i32>} : memref<16x1xf32, #tpu.memory_space<vmem>>, vector<16x1xf32>,
        } else {
        }
      } else {
      }
      %c0_i32_20 = arith.constant 0 : i32
      %29 = arith.cmpi eq, %arg1, %c0_i32_20 : i32
      %30 = arith.extui %29 : i1 to i32
      %c0_i32_21 = arith.constant 0 : i32
      %31 = arith.cmpi ne, %30, %c0_i32_21 : i32
      scf.if %31 {
        %c0_22 = arith.constant 0 : index
        %c0_23 = arith.constant 0 : index
        %32 = vector.load %arg11[%c0_22, %c0_23] : memref<16x1xf32, #tpu.memory_space<vmem>>, vector<16x1xf32>
        %33 = vector.broadcast %32 : vector<16x1xf32> to vector<16x512xf32>
        %34 = arith.subf %25, %33 : vector<16x512xf32>
        %35 = arith.truncf %34 : vector<16x512xf32> to vector<16x512xbf16>
        %c0_24 = arith.constant 0 : index
        %c0_25 = arith.constant 0 : index
        %36 = vector.load %arg7[%c0_24, %c0_25] : memref<16x512xbf16, #tpu.memory_space<vmem>>, vector<16x512xbf16>
        tpu.vector_store %arg7[%c0_24, %c0_25], %35 {strides = array<i32>} : memref<16x512xbf16, #tpu.memory_space<vmem>>, vector<16x512xbf16>,
      } else {
      }
    } else {
    }
    return
  }
  func.func @transform_0(%arg0: i32, %arg1: i32, %arg2: i32, %arg3: i32) -> (i32, i32, i32) {
    %c0_i32 = arith.constant 0 : i32
    %c0_i32_0 = arith.constant 0 : i32
    %c0_i32_1 = arith.constant 0 : i32
    return %c0_i32, %arg0, %c0_i32_0 : i32, i32, i32
  }
  func.func @transform_1(%arg0: i32, %arg1: i32, %arg2: i32, %arg3: i32) -> (i32, i32) {
    %c0_i32 = arith.constant 0 : i32
    return %arg3, %arg2 : i32, i32
  }
  func.func @transform_2(%arg0: i32, %arg1: i32, %arg2: i32, %arg3: i32) -> (i32, i32) {
    %c0_i32 = arith.constant 0 : i32
    %c0_i32_0 = arith.constant 0 : i32
    return %c0_i32, %arg2 : i32, i32
  }
  func.func @transform_3(%arg0: i32, %arg1: i32, %arg2: i32, %arg3: i32) -> (i32, i32) {
    %0 = arith.muli %arg2, %arg1 : i32
    %c0_i32 = arith.constant 0 : i32
    return %arg0, %0 : i32, i32
  }
}

</mosaic_0001>

<llo_original>
// kernel: tpu_custom_call.1
$region0: #{tpu_custom_call.1}
  #allocation0 [shape = 'u32[]', space=smem, size = 0x4, offset = 0x4, fixed_abs, tag = 'smem constant byte address 0x4 - core index']
  #allocation1 [shape = 'u32[144,128]{1,0:T(1,128)}', space=vmem, size = 0x12000, scoped, tag = 'internal scratch']
  #allocation2 [shape = 'f32[16,512]{1,0:T(8,128)}', space=vmem, size = 0x8000, scoped, tag = 'scratch operand']
  #allocation3 [shape = 'f32[16,1]{1,0:T(8,128)}', space=vmem, size = 0x2000, scoped, tag = 'scratch operand']
  #allocation4 [shape = 'f32[16,1]{1,0:T(8,128)}', space=vmem, size = 0x2000, scoped, tag = 'scratch operand']
  #allocation5 [shape = 'f32[16,1]{1,0:T(8,128)}', space=vmem, size = 0x2000, scoped, tag = 'scratch operand']
  %s0 = inlined_call_operand.hbm [shape: bf16[1,16,128], index: 0, kind: input, shape index: {}]
  %s1 = inlined_call_operand.hbm [shape: bf16[128,512], index: 1, kind: input, shape index: {}]
  %s2 = inlined_call_operand.hbm [shape: bf16[1,512], index: 2, kind: input, shape index: {}]
  %s3 = inlined_call_operand.hbm [shape: bf16[16,512], index: 3, kind: output, shape index: {}]
  %s4 = sld [smem:[#allocation0]]
  $region54: #{tpu_custom_call.1} parent=0
    _
  %s6 = ssub.s32 1, %s4
  %s7 = scalar_select 0, %s6, %s4
  $region1: #{tpu_custom_call.1} parent=0
    #allocation6 [shape = 'u8[4096]{0}', space=vmem, size = 0x1000, scoped, tag = 'input window, operand 0, single buffered']
    #allocation7 [shape = 's32[1]{0}', space=sflag, size = 0x4, scoped, tag = 'scoped memory for tpu_custom_call.1']
    #allocation8 [shape = 's32[1]{0}', space=sflag, size = 0x4, scoped, tag = 'scoped memory for tpu_custom_call.1']
    #allocation9 [shape = 'u8[131072]{0}', space=vmem, size = 0x20000, scoped, tag = 'input window, operand 1, single buffered']
    #allocation10 [shape = 's32[1]{0}', space=sflag, size = 0x4, scoped, tag = 'scoped memory for tpu_custom_call.1']
    #allocation11 [shape = 'u8[2048]{0}', space=vmem, size = 0x800, scoped, tag = 'input window, operand 2, single buffered']
    #allocation12 [shape = 'u8[16384]{0}', space=vmem, size = 0x4000, scoped, tag = 'output window, operand 0, single buffered']
    %8 = vsyncpa [#allocation7], 0
    %9 = vsyncpa [#allocation10], 0
    %10 = vsyncpa [#allocation8], 0
    // Predicated region
    $region2: #{tpu_custom_call.1} parent=1 // pred_check
      _
    $region3: #{tpu_custom_call.1} parent=1 // pred_check_branch
      %12 = sbr.rel (0) target = $region5
    $region4: #{tpu_custom_call.1} parent=1 // pred_region
      %s14 = ssub.s32 128, 128
      %15 = vsyncadd [#allocation7], %s14
      %s16 = sshll.u32 [#allocation6], 4
      %s17 = int_to_ptr.vmem [resolvable:$true] %s16
      %22 = dma.hbm_to_vmem [thread:$0]  %s0, 128, %s17, [#allocation7], 64, 64, 4
    $region5: #{tpu_custom_call.1} parent=1 // pred_fallthru
      _
    // Predicated region
    $region6: #{tpu_custom_call.1} parent=1 // pred_check
      _
    $region7: #{tpu_custom_call.1} parent=1 // pred_check_branch
      %24 = sbr.rel (0) target = $region9
    $region8: #{tpu_custom_call.1} parent=1 // pred_region
      %s26 = ssub.s32 4096, 4096
      %27 = vsyncadd [#allocation10], %s26
      %s28 = sshll.u32 [#allocation9], 4
      %s29 = int_to_ptr.vmem [resolvable:$true] %s28
      %34 = dma.hbm_to_vmem [thread:$0]  %s1, 4096, %s29, [#allocation10], 256, 256, 16
    $region9: #{tpu_custom_call.1} parent=1 // pred_fallthru
      _
    // Predicated region
    $region10: #{tpu_custom_call.1} parent=1 // pred_check
      _
    $region11: #{tpu_custom_call.1} parent=1 // pred_check_branch
      %36 = sbr.rel (0) target = $region13
    $region12: #{tpu_custom_call.1} parent=1 // pred_region
      %s38 = ssub.s32 64, 64
      %39 = vsyncadd [#allocation10], %s38
      %s41 = sshll.u32 [#allocation11], 4
      %s42 = int_to_ptr.vmem [resolvable:$true] %s41
      %44 = dma.hbm_to_vmem [thread:$0]  %s2, 64, %s42, [#allocation10]
    $region13: #{tpu_custom_call.1} parent=1 // pred_fallthru
      _
    // Predicated region
    $region14: #{tpu_custom_call.1} parent=1 // pred_check
      _
    $region15: #{tpu_custom_call.1} parent=1 // pred_check_branch
      %46 = sbr.rel (0) target = $region17
    $region16: #{tpu_custom_call.1} parent=1 // pred_region
      %47 = dma.done [#allocation7], 128
    $region17: #{tpu_custom_call.1} parent=1 // pred_fallthru
      _
    // Predicated region
    $region18: #{tpu_custom_call.1} parent=1 // pred_check
      _
    $region19: #{tpu_custom_call.1} parent=1 // pred_check_branch
      %49 = sbr.rel (0) target = $region21
    $region20: #{tpu_custom_call.1} parent=1 // pred_region
      %50 = dma.done [#allocation10], 4096
    $region21: #{tpu_custom_call.1} parent=1 // pred_fallthru
      _
    // Predicated region
    $region22: #{tpu_custom_call.1} parent=1 // pred_check
      _
    $region23: #{tpu_custom_call.1} parent=1 // pred_check_branch
      %52 = sbr.rel (0) target = $region25
    $region24: #{tpu_custom_call.1} parent=1 // pred_region
      %53 = dma.done [#allocation10], 64
    $region25: #{tpu_custom_call.1} parent=1 // pred_fallthru
      _
    %s54 = smul.u32 0, 0
    %s55 = smul.u32 4, %s54
    %p57 = scmp.eq.s32.totalorder 0, 0
    %p58 = scmp.eq.s32.totalorder 0, 0
    %p59 = pnand %p57, %p58
    %p60 = pneg %p59
    %p61 = scmp.eq.s32.totalorder 0, 0
    %p62 = pnand %p60, %p61
    %p63 = pneg %p62
    // Predicated region
    $region26: #{tpu_custom_call.1} parent=1 // pred_check
      _
    $region27: #{tpu_custom_call.1} parent=1 // pred_check_branch
      %65 = sbr.rel (%p62) target = $region29
    $region28: #{tpu_custom_call.1} parent=1 // pred_region
      %vm66 = vcmask 7168
      %67 = vst.msk [vmem:[#allocation3] sm:$0xff] %vm66, -inf
      %68 = vst.msk [vmem:[#allocation3 + $0x8] sm:$0xff] %vm66, -inf
      %69 = vst.msk [vmem:[#allocation4] sm:$0xff] %vm66, 0.0
      %70 = vst.msk [vmem:[#allocation4 + $0x8] sm:$0xff] %vm66, 0.0
    $region29: #{tpu_custom_call.1} parent=1 // pred_fallthru
      _
    // Predicated region
    $region30: #{tpu_custom_call.1} parent=1 // pred_check
      %p71 = pneg %p61
    $region31: #{tpu_custom_call.1} parent=1 // pred_check_branch
      %73 = sbr.rel (%p71) target = $region33
    $region32: #{tpu_custom_call.1} parent=1 // pred_region
      %74 = vst [vmem:[#allocation2] sm:$0xff] 0.0
      %75 = vst [vmem:[#allocation2 + $0x8] sm:$0xff] 0.0
      %76 = vst [vmem:[#allocation2 + $0x10] sm:$0xff] 0.0
      %77 = vst [vmem:[#allocation2 + $0x18] sm:$0xff] 0.0
      %78 = vst [vmem:[#allocation2 + $0x20] sm:$0xff] 0.0
      %79 = vst [vmem:[#allocation2 + $0x28] sm:$0xff] 0.0
      %80 = vst [vmem:[#allocation2 + $0x30] sm:$0xff] 0.0
      %81 = vst [vmem:[#allocation2 + $0x38] sm:$0xff] 0.0
    $region33: #{tpu_custom_call.1} parent=1 // pred_fallthru
      _
    %v82 = vld [vmem:[#allocation9] sm:$0xff]
    %v83 = vld [vmem:[#allocation9 + $0x8] sm:$0xff]
    %v84 = vld [vmem:[#allocation9 + $0x10] sm:$0xff]
    %v85 = vld [vmem:[#allocation9 + $0x18] sm:$0xff]
    %v86 = vld [vmem:[#allocation9 + $0x20] sm:$0xff]
    %v87 = vld [vmem:[#allocation9 + $0x28] sm:$0xff]
    %v88 = vld [vmem:[#allocation9 + $0x30] sm:$0xff]
    %v89 = vld [vmem:[#allocation9 + $0x38] sm:$0xff]
    %v90 = vld [vmem:[#allocation9 + $0x40] sm:$0xff]
    %v91 = vld [vmem:[#allocation9 + $0x48] sm:$0xff]
    %v92 = vld [vmem:[#allocation9 + $0x50] sm:$0xff]
    %v93 = vld [vmem:[#allocation9 + $0x58] sm:$0xff]
    %v94 = vld [vmem:[#allocation9 + $0x60] sm:$0xff]
    %v95 = vld [vmem:[#allocation9 + $0x68] sm:$0xff]
    %v96 = vld [vmem:[#allocation9 + $0x70] sm:$0xff]
    %v97 = vld [vmem:[#allocation9 + $0x78] sm:$0xff]
    %v98 = vld [vmem:[#allocation9 + $0x80] sm:$0xff]
    %v99 = vld [vmem:[#allocation9 + $0x88] sm:$0xff]
    %v100 = vld [vmem:[#allocation9 + $0x90] sm:$0xff]
    %v101 = vld [vmem:[#allocation9 + $0x98] sm:$0xff]
    %v102 = vld [vmem:[#allocation9 + $0xa0] sm:$0xff]
    %v103 = vld [vmem:[#allocation9 + $0xa8] sm:$0xff]
    %v104 = vld [vmem:[#allocation9 + $0xb0] sm:$0xff]
    %v105 = vld [vmem:[#allocation9 + $0xb8] sm:$0xff]
    %v106 = vld [vmem:[#allocation9 + $0xc0] sm:$0xff]
    %v107 = vld [vmem:[#allocation9 + $0xc8] sm:$0xff]
    %v108 = vld [vmem:[#allocation9 + $0xd0] sm:$0xff]
    %v109 = vld [vmem:[#allocation9 + $0xd8] sm:$0xff]
    %v110 = vld [vmem:[#allocation9 + $0xe0] sm:$0xff]
    %v111 = vld [vmem:[#allocation9 + $0xe8] sm:$0xff]
    %v112 = vld [vmem:[#allocation9 + $0xf0] sm:$0xff]
    %v113 = vld [vmem:[#allocation9 + $0xf8] sm:$0xff]
    %v114 = vld [vmem:[#allocation2] sm:$0xff]
    %v115 = vld [vmem:[#allocation2 + $0x8] sm:$0xff]
    %v116 = vld [vmem:[#allocation2 + $0x10] sm:$0xff]
    %v117 = vld [vmem:[#allocation2 + $0x18] sm:$0xff]
    %v118 = vld [vmem:[#allocation2 + $0x20] sm:$0xff]
    %v119 = vld [vmem:[#allocation2 + $0x28] sm:$0xff]
    %v120 = vld [vmem:[#allocation2 + $0x30] sm:$0xff]
    %v121 = vld [vmem:[#allocation2 + $0x38] sm:$0xff]
    %s122 = smul.u32 0, 2
    %s123 = smul.addr %s122, 4
    %s124 = scalar_lea.vmem [#allocation6], %s123
    %v125 = vld [vmem:[%s124] sm:$0xf]
    %v126 = vld [vmem:[%s124 + $0x4] sm:$0xf]
    %v129 = vunpack.c.l.b16 %v125
    %v130 = vunpack.c.l.b16 %v126
    %v131 = vpack.c.b16 %v130, %v129
    %v165 = vunpack.c.l.b16 %v82
    %v166 = vunpack.c.h.b16 %v82
    %v167 = vunpack.c.l.b16 %v83
    %v168 = vunpack.c.h.b16 %v83
    %v169 = vunpack.c.l.b16 %v84
    %v170 = vunpack.c.h.b16 %v84
    %v171 = vunpack.c.l.b16 %v85
    %v172 = vunpack.c.h.b16 %v85
    %v173 = vunpack.c.l.b16 %v86
    %v174 = vunpack.c.h.b16 %v86
    %v175 = vunpack.c.l.b16 %v87
    %v176 = vunpack.c.h.b16 %v87
    %v177 = vunpack.c.l.b16 %v88
    %v178 = vunpack.c.h.b16 %v88
    %v179 = vunpack.c.l.b16 %v89
    %v180 = vunpack.c.h.b16 %v89
    %v181 = vunpack.c.l.b16 %v90
    %v182 = vunpack.c.h.b16 %v90
    %v183 = vunpack.c.l.b16 %v91
    %v184 = vunpack.c.h.b16 %v91
    %v185 = vunpack.c.l.b16 %v92
    %v186 = vunpack.c.h.b16 %v92
    %v187 = vunpack.c.l.b16 %v93
    %v188 = vunpack.c.h.b16 %v93
    %v189 = vunpack.c.l.b16 %v94
    %v190 = vunpack.c.h.b16 %v94
    %v191 = vunpack.c.l.b16 %v95
    %v192 = vunpack.c.h.b16 %v95
    %v193 = vunpack.c.l.b16 %v96
    %v194 = vunpack.c.h.b16 %v96
    %v195 = vunpack.c.l.b16 %v97
    %v196 = vunpack.c.h.b16 %v97
    %v197 = vunpack.c.l.b16 %v98
    %v198 = vunpack.c.h.b16 %v98
    %v199 = vunpack.c.l.b16 %v99
    %v200 = vunpack.c.h.b16 %v99
    %v201 = vunpack.c.l.b16 %v100
    %v202 = vunpack.c.h.b16 %v100
    %v203 = vunpack.c.l.b16 %v101
    %v204 = vunpack.c.h.b16 %v101
    %v205 = vunpack.c.l.b16 %v102
    %v206 = vunpack.c.h.b16 %v102
    %v207 = vunpack.c.l.b16 %v103
    %v208 = vunpack.c.h.b16 %v103
    %v209 = vunpack.c.l.b16 %v104
    %v210 = vunpack.c.h.b16 %v104
    %v211 = vunpack.c.l.b16 %v105
    %v212 = vunpack.c.h.b16 %v105
    %v213 = vunpack.c.l.b16 %v106
    %v214 = vunpack.c.h.b16 %v106
    %v215 = vunpack.c.l.b16 %v107
    %v216 = vunpack.c.h.b16 %v107
    %v217 = vunpack.c.l.b16 %v108
    %v218 = vunpack.c.h.b16 %v108
    %v219 = vunpack.c.l.b16 %v109
    %v220 = vunpack.c.h.b16 %v109
    %v221 = vunpack.c.l.b16 %v110
    %v222 = vunpack.c.h.b16 %v110
    %v223 = vunpack.c.l.b16 %v111
    %v224 = vunpack.c.h.b16 %v111
    %v225 = vunpack.c.l.b16 %v112
    %v226 = vunpack.c.h.b16 %v112
    %v227 = vunpack.c.l.b16 %v113
    %v228 = vunpack.c.h.b16 %v113
    %v229 = vpack.c.b16 %v169, %v165
    %v230 = vpack.c.b16 %v170, %v166
    %v231 = vpack.c.b16 %v171, %v167
    %v232 = vpack.c.b16 %v172, %v168
    %v233 = vpack.c.b16 %v177, %v173
    %v234 = vpack.c.b16 %v178, %v174
    %v235 = vpack.c.b16 %v179, %v175
    %v236 = vpack.c.b16 %v180, %v176
    %v237 = vpack.c.b16 %v185, %v181
    %v238 = vpack.c.b16 %v186, %v182
    %v239 = vpack.c.b16 %v187, %v183
    %v240 = vpack.c.b16 %v188, %v184
    %v241 = vpack.c.b16 %v193, %v189
    %v242 = vpack.c.b16 %v194, %v190
    %v243 = vpack.c.b16 %v195, %v191
    %v244 = vpack.c.b16 %v196, %v192
    %v245 = vpack.c.b16 %v201, %v197
    %v246 = vpack.c.b16 %v202, %v198
    %v247 = vpack.c.b16 %v203, %v199
    %v248 = vpack.c.b16 %v204, %v200
    %v249 = vpack.c.b16 %v209, %v205
    %v250 = vpack.c.b16 %v210, %v206
    %v251 = vpack.c.b16 %v211, %v207
    %v252 = vpack.c.b16 %v212, %v208
    %v253 = vpack.c.b16 %v217, %v213
    %v254 = vpack.c.b16 %v218, %v214
    %v255 = vpack.c.b16 %v219, %v215
    %v256 = vpack.c.b16 %v220, %v216
    %v257 = vpack.c.b16 %v225, %v221
    %v258 = vpack.c.b16 %v226, %v222
    %v259 = vpack.c.b16 %v227, %v223
    %v260 = vpack.c.b16 %v228, %v224
    %293 = vmatprep.subr.bf16.mxu0 %v258
    %294 = vmatpush1.bf16.msra.mxu0 %v257
    %295 = vmatprep.subr.bf16.mxu0 %v254
    %296 = vmatpush1.bf16.msra.mxu0 %v253
    %297 = vmatprep.subr.bf16.mxu0 %v250
    %298 = vmatpush1.bf16.msra.mxu0 %v249
    %299 = vmatprep.subr.bf16.mxu0 %v246
    %300 = vmatpush1.bf16.msra.mxu0 %v245
    %301 = vmatprep.subr.bf16.mxu0 %v242
    %302 = vmatpush1.bf16.msra.mxu0 %v241
    %303 = vmatprep.subr.bf16.mxu0 %v238
    %304 = vmatpush1.bf16.msra.mxu0 %v237
    %305 = vmatprep.subr.bf16.mxu0 %v234
    %306 = vmatpush1.bf16.msra.mxu0 %v233
    %307 = vmatprep.subr.bf16.mxu0 %v230
    %308 = vmatpush1.bf16.msra.mxu0 %v229
    %309 = vmatprep.subr.bf16.mxu0 0
    %310 = vmatpush2.bf16.msra.mxu0 0
    %311 = vmatprep.subr.bf16.mxu0 0
    %312 = vmatpush2.bf16.msra.mxu0 0
    %313 = vmatprep.subr.bf16.mxu0 0
    %314 = vmatpush2.bf16.msra.mxu0 0
    %315 = vmatprep.subr.bf16.mxu0 0
    %316 = vmatpush2.bf16.msra.mxu0 0
    %317 = vmatprep.subr.bf16.mxu0 0
    %318 = vmatpush2.bf16.msra.mxu0 0
    %319 = vmatprep.subr.bf16.mxu0 0
    %320 = vmatpush2.bf16.msra.mxu0 0
    %321 = vmatprep.subr.bf16.mxu0 0
    %322 = vmatpush2.bf16.msra.mxu0 0
    %323 = vmatprep.subr.bf16.mxu0 0
    %324 = vmatpush2.bf16.msra.mxu0 0
    %325 = vmatprep.mubr.bf16.mxu0 0
    %326 = vmatmul.mubr.bf16.gmra.mxu0 %v131
    %v327 = vpop.f32.mrf.mxu0
    %v328 = vadd.f32 0.0, %v327
    %v329 = vpop.f32.mrf.mxu0
    %v330 = vadd.f32 0.0, %v329
    %v331 = vpop.f32.mrf.mxu0
    %v332 = vadd.f32 0.0, %v331
    %v333 = vpop.f32.mrf.mxu0
    %v334 = vadd.f32 0.0, %v333
    %335 = vdwg.mxu0
    %336 = vmatprep.subr.bf16.mxu0 %v260
    %337 = vmatpush1.bf16.msra.mxu0 %v259
    %338 = vmatprep.subr.bf16.mxu0 %v256
    %339 = vmatpush1.bf16.msra.mxu0 %v255
    %340 = vmatprep.subr.bf16.mxu0 %v252
    %341 = vmatpush1.bf16.msra.mxu0 %v251
    %342 = vmatprep.subr.bf16.mxu0 %v248
    %343 = vmatpush1.bf16.msra.mxu0 %v247
    %344 = vmatprep.subr.bf16.mxu0 %v244
    %345 = vmatpush1.bf16.msra.mxu0 %v243
    %346 = vmatprep.subr.bf16.mxu0 %v240
    %347 = vmatpush1.bf16.msra.mxu0 %v239
    %348 = vmatprep.subr.bf16.mxu0 %v236
    %349 = vmatpush1.bf16.msra.mxu0 %v235
    %350 = vmatprep.subr.bf16.mxu0 %v232
    %351 = vmatpush1.bf16.msra.mxu0 %v231
    %352 = vmatprep.subr.bf16.mxu0 0
    %353 = vmatpush2.bf16.msra.mxu0 0
    %354 = vmatprep.subr.bf16.mxu0 0
    %355 = vmatpush2.bf16.msra.mxu0 0
    %356 = vmatprep.subr.bf16.mxu0 0
    %357 = vmatpush2.bf16.msra.mxu0 0
    %358 = vmatprep.subr.bf16.mxu0 0
    %359 = vmatpush2.bf16.msra.mxu0 0
    %360 = vmatprep.subr.bf16.mxu0 0
    %361 = vmatpush2.bf16.msra.mxu0 0
    %362 = vmatprep.subr.bf16.mxu0 0
    %363 = vmatpush2.bf16.msra.mxu0 0
    %364 = vmatprep.subr.bf16.mxu0 0
    %365 = vmatpush2.bf16.msra.mxu0 0
    %366 = vmatprep.subr.bf16.mxu0 0
    %367 = vmatpush2.bf16.msra.mxu0 0
    %368 = vmatprep.mubr.bf16.mxu0 0
    %369 = vmatmul.mubr.bf16.gmra.mxu0 %v131
    %v370 = vpop.f32.mrf.mxu0
    %v371 = vadd.f32 0.0, %v370
    %v372 = vpop.f32.mrf.mxu0
    %v373 = vadd.f32 0.0, %v372
    %v374 = vpop.f32.mrf.mxu0
    %v375 = vadd.f32 0.0, %v374
    %v376 = vpop.f32.mrf.mxu0
    %v377 = vadd.f32 0.0, %v376
    %378 = vdwg.mxu0
    %v379 = vadd.f32 %v114, %v328
    %v380 = vadd.f32 %v115, %v330
    %v381 = vadd.f32 %v116, %v371
    %v382 = vadd.f32 %v117, %v373
    %v383 = vadd.f32 %v118, %v332
    %v384 = vadd.f32 %v119, %v334
    %v385 = vadd.f32 %v120, %v375
    %v386 = vadd.f32 %v121, %v377
    %387 = vst [vmem:[#allocation2] sm:$0xff] %v379
    %388 = vst [vmem:[#allocation2 + $0x8] sm:$0xff] %v380
    %389 = vst [vmem:[#allocation2 + $0x10] sm:$0xff] %v381
    %390 = vst [vmem:[#allocation2 + $0x18] sm:$0xff] %v382
    %391 = vst [vmem:[#allocation2 + $0x20] sm:$0xff] %v383
    %392 = vst [vmem:[#allocation2 + $0x28] sm:$0xff] %v384
    %393 = vst [vmem:[#allocation2 + $0x30] sm:$0xff] %v385
    %394 = vst [vmem:[#allocation2 + $0x38] sm:$0xff] %v386
    // Predicated region
    $region34: #{tpu_custom_call.1} parent=1 // pred_check
      %p395 = pneg %p61
    $region35: #{tpu_custom_call.1} parent=1 // pred_check_branch
      %397 = sbr.rel (%p395) target = $region37
    $region36: #{tpu_custom_call.1} parent=1 // pred_region
      %v398 = vld [vmem:[#allocation2] sm:$0xff]
      %v399 = vld [vmem:[#allocation2 + $0x8] sm:$0xff]
      %v400 = vld [vmem:[#allocation2 + $0x10] sm:$0xff]
      %v401 = vld [vmem:[#allocation2 + $0x18] sm:$0xff]
      %v402 = vld [vmem:[#allocation2 + $0x20] sm:$0xff]
      %v403 = vld [vmem:[#allocation2 + $0x28] sm:$0xff]
      %v404 = vld [vmem:[#allocation2 + $0x30] sm:$0xff]
      %v405 = vld [vmem:[#allocation2 + $0x38] sm:$0xff]
      %v406 = vld [vmem:[#allocation11] sm:$0xf]
      %v407 = vunpack.c.l.bf16 %v406
      %v409 = vlaneseq
      %v410 = vshrl.u32 %v409, 7
      %v411 = vsub.s32 0, %v410
      %v412 = vrot.slane %v407, %v411
      %v413 = vlaneseq
      %v414 = vshrl.u32 %v413, 7
      %v415 = vsub.s32 2, %v414
      %v416 = vrot.slane %v407, %v415
      %v417 = vlaneseq
      %v418 = vshrl.u32 %v417, 7
      %v419 = vsub.s32 4, %v418
      %v420 = vrot.slane %v407, %v419
      %v421 = vlaneseq
      %v422 = vshrl.u32 %v421, 7
      %v423 = vsub.s32 6, %v422
      %v424 = vrot.slane %v407, %v423
      %v429 = vlaneseq
      %v430 = vshrl.u32 %v429, 7
      %v431 = vsub.s32 0, %v430
      %v432 = vrot.slane %v412, %v431
      %v433 = vlaneseq
      %v434 = vshrl.u32 %v433, 7
      %v435 = vsub.s32 0, %v434
      %v436 = vrot.slane %v416, %v435
      %v437 = vlaneseq
      %v438 = vshrl.u32 %v437, 7
      %v439 = vsub.s32 0, %v438
      %v440 = vrot.slane %v420, %v439
      %v441 = vlaneseq
      %v442 = vshrl.u32 %v441, 7
      %v443 = vsub.s32 0, %v442
      %v444 = vrot.slane %v424, %v443
      %v445 = vadd.f32 %v398, %v432
      %v446 = vadd.f32 %v399, %v436
      %v447 = vadd.f32 %v400, %v440
      %v448 = vadd.f32 %v401, %v444
      %v449 = vadd.f32 %v402, %v432
      %v450 = vadd.f32 %v403, %v436
      %v451 = vadd.f32 %v404, %v440
      %v452 = vadd.f32 %v405, %v444
      // Predicated region
      $region38: #{tpu_custom_call.1} parent=36 // pred_check
        %p453 = pneg %p57
      $region39: #{tpu_custom_call.1} parent=36 // pred_check_branch
        %455 = sbr.rel (%p453) target = $region41
      $region40: #{tpu_custom_call.1} parent=36 // pred_region
        %v456 = vld [vmem:[#allocation3] sm:$0xff]
        %v457 = vld [vmem:[#allocation3 + $0x8] sm:$0xff]
        %v458 = vmax.f32 %v445, %v447
        %v459 = vmax.f32 %v446, %v448
        %v460 = vmax.f32 %v458, %v459
        %461 = vmax.xlane.f32.xlu0 %v460
        %v462 = vpop.xlane.xlu0 %461
        %v463 = vmax.f32 %v449, %v451
        %v464 = vmax.f32 %v450, %v452
        %v465 = vmax.f32 %v463, %v464
        %466 = vmax.xlane.f32.xlu0 %v465
        %v467 = vpop.xlane.xlu0 %466
        %v468 = vmax.f32 %v456, %v462
        %v469 = vmax.f32 %v457, %v467
        %v470 = vld [vmem:[#allocation4] sm:$0xff]
        %v471 = vld [vmem:[#allocation4 + $0x8] sm:$0xff]
        %v472 = vsub.f32 %v456, %v468
        %v473 = vsub.f32 %v457, %v469
        %v474 = vmul.f32 %v472, 1.442695
        %v475 = vpow.pop %v474
        %v476 = vmul.f32 %v473, 1.442695
        %v477 = vpow.pop %v476
        %v478 = vmul.f32 %v470, %v475
        %v479 = vmul.f32 %v471, %v477
        %481 = vset.pattern.permute.xlu0 0
        %482 = vperm.xlu0 %481, %v468
        %v483 = vpop.permute.xlu0 %482
        %486 = vset.pattern.permute.xlu0 0
        %487 = vperm.xlu0 %486, %v469
        %v488 = vpop.permute.xlu0 %487
        %v490 = vsub.f32 %v445, %v483
        %v491 = vsub.f32 %v446, %v483
        %v492 = vsub.f32 %v447, %v483
        %v493 = vsub.f32 %v448, %v483
        %v494 = vsub.f32 %v449, %v488
        %v495 = vsub.f32 %v450, %v488
        %v496 = vsub.f32 %v451, %v488
        %v497 = vsub.f32 %v452, %v488
        %v498 = vmul.f32 %v490, 1.442695
        %v499 = vpow.pop %v498
        %v500 = vmul.f32 %v491, 1.442695
        %v501 = vpow.pop %v500
        %v502 = vmul.f32 %v492, 1.442695
        %v503 = vpow.pop %v502
        %v504 = vmul.f32 %v493, 1.442695
        %v505 = vpow.pop %v504
        %v506 = vmul.f32 %v494, 1.442695
        %v507 = vpow.pop %v506
        %v508 = vmul.f32 %v495, 1.442695
        %v509 = vpow.pop %v508
        %v510 = vmul.f32 %v496, 1.442695
        %v511 = vpow.pop %v510
        %v512 = vmul.f32 %v497, 1.442695
        %v513 = vpow.pop %v512
        %v514 = vadd.f32 %v499, %v501
        %v515 = vadd.f32 %v514, %v503
        %v516 = vadd.f32 %v515, %v505
        %517 = vadd.xlane.f32.xlu0 %v516
        %v518 = vpop.xlane.xlu0 %517
        %v519 = vadd.f32 %v507, %v509
        %v520 = vadd.f32 %v519, %v511
        %v521 = vadd.f32 %v520, %v513
        %522 = vadd.xlane.f32.xlu0 %v521
        %v523 = vpop.xlane.xlu0 %522
        %v524 = vadd.f32 %v478, %v518
        %v525 = vadd.f32 %v479, %v523
        %vm526 = vcmask 7168
        %527 = vst.msk [vmem:[#allocation4] sm:$0xff] %vm526, %v524
        %528 = vst.msk [vmem:[#allocation4 + $0x8] sm:$0xff] %vm526, %v525
        %529 = vst.msk [vmem:[#allocation3] sm:$0xff] %vm526, %v468
        %530 = vst.msk [vmem:[#allocation3 + $0x8] sm:$0xff] %vm526, %v469
        // Predicated region
        $region42: #{tpu_custom_call.1} parent=40 // pred_check
          %p531 = pneg %p58
        $region43: #{tpu_custom_call.1} parent=40 // pred_check_branch
          %533 = sbr.rel (%p531) target = $region45
        $region44: #{tpu_custom_call.1} parent=40 // pred_region
          %v534 = vld [vmem:[#allocation3] sm:$0xff]
          %v535 = vld [vmem:[#allocation3 + $0x8] sm:$0xff]
          %v536 = vld [vmem:[#allocation4] sm:$0xff]
          %v537 = vld [vmem:[#allocation4 + $0x8] sm:$0xff]
          %v538 = vlog2.pop %v536
          %v539 = vmul.f32 %v538, 0.6931472
          %v540 = vlog2.pop %v537
          %v541 = vmul.f32 %v540, 0.6931472
          %v542 = vadd.f32 %v534, %v539
          %v543 = vadd.f32 %v535, %v541
          %544 = vst.msk [vmem:[#allocation5] sm:$0xff] %vm526, %v542
          %545 = vst.msk [vmem:[#allocation5 + $0x8] sm:$0xff] %vm526, %v543
        $region45: #{tpu_custom_call.1} parent=40 // pred_fallthru
          _
        %v546 = vld [vmem:[#allocation5] sm:$0xff]
        %v547 = vld [vmem:[#allocation5 + $0x8] sm:$0xff]
        %549 = vset.pattern.permute.xlu0 0
        %550 = vperm.xlu0 %549, %v546
        %v551 = vpop.permute.xlu0 %550
        %554 = vset.pattern.permute.xlu0 0
        %555 = vperm.xlu0 %554, %v547
        %v556 = vpop.permute.xlu0 %555
        %v558 = vsub.f32 %v445, %v551
        %v559 = vsub.f32 %v446, %v551
        %v560 = vsub.f32 %v447, %v551
        %v561 = vsub.f32 %v448, %v551
        %v562 = vsub.f32 %v449, %v556
        %v563 = vsub.f32 %v450, %v556
        %v564 = vsub.f32 %v451, %v556
        %v565 = vsub.f32 %v452, %v556
        %v566 = vpack.c.bf16 %v562, %v558
        %v567 = vpack.c.bf16 %v563, %v559
        %v568 = vpack.c.bf16 %v564, %v560
        %v569 = vpack.c.bf16 %v565, %v561
        %v574 = vunpack.c.l.b16 %v566
        %v575 = vunpack.c.l.b16 %v567
        %v576 = vunpack.c.l.b16 %v568
        %v577 = vunpack.c.l.b16 %v569
        %v578 = vunpack.c.h.b16 %v566
        %v579 = vunpack.c.h.b16 %v567
        %v580 = vunpack.c.h.b16 %v568
        %v581 = vunpack.c.h.b16 %v569
        %v582 = vpack.c.b16 %v575, %v574
        %v583 = vpack.c.b16 %v577, %v576
        %v584 = vpack.c.b16 %v579, %v578
        %v585 = vpack.c.b16 %v581, %v580
        %590 = vst [vmem:[#allocation12] sm:$0xff] %v582
        %591 = vst [vmem:[#allocation12 + $0x8] sm:$0xff] %v583
        %592 = vst [vmem:[#allocation12 + $0x10] sm:$0xff] %v584
        %593 = vst [vmem:[#allocation12 + $0x18] sm:$0xff] %v585
      $region41: #{tpu_custom_call.1} parent=36 // pred_fallthru
        _
    $region37: #{tpu_custom_call.1} parent=1 // pred_fallthru
      _
    // Predicated region
    $region46: #{tpu_custom_call.1} parent=1 // pred_check
      _
    $region47: #{tpu_custom_call.1} parent=1 // pred_check_branch
      %595 = sbr.rel (0) target = $region49
    $region48: #{tpu_custom_call.1} parent=1 // pred_region
      %s596 = smul.u32 0, 0
      %s597 = smul.u32 4, %s596
      %s599 = ssub.s32 512, 512
      %600 = vsyncadd [#allocation8], %s599
      %s601 = smul.addr %s597, 64
      %s602 = scalar_lea.hbm %s3, %s601
      %s603 = sshll.u32 [#allocation12], 4
      %s604 = int_to_ptr.vmem [resolvable:$true] %s603
      %609 = dma.vmem_to_hbm [thread:$0]  %s604, 512, %s602, [#allocation8], 256, 256, 16
    $region49: #{tpu_custom_call.1} parent=1 // pred_fallthru
      _
    // Predicated region
    $region50: #{tpu_custom_call.1} parent=1 // pred_check
      _
    $region51: #{tpu_custom_call.1} parent=1 // pred_check_branch
      %611 = sbr.rel (0) target = $region53
    $region52: #{tpu_custom_call.1} parent=1 // pred_region
      %612 = dma.done [#allocation8], 512
    $region53: #{tpu_custom_call.1} parent=1 // pred_fallthru
      _
    %613 = vsyncpa [#allocation7], 1
    %614 = vsyncpa [#allocation10], 1
    %615 = vsyncpa [#allocation8], 1

</llo_original>
